<compile_context>
chip_gen: v6e
topology: v6e:2x2x1
jax: 0.10.0
libtpu: 0.0.40
codegen_flags: <defaults>
</compile_context>

<pallas_src>
import jax
import jax.numpy as jnp
from jax import lax
from jax.experimental import pallas as pl
from jax.experimental.pallas import tpu as pltpu

LANE = 128
SUBLANE = 8
_VMEM_LIMIT_BYTES = 48 * 1024 * 1024   # safe on v5e/v6e (128 MiB) and v7x (64 MiB)


def _round_up(x, m):
    return ((x + m - 1) // m) * m


def _pick_tile(dim, pref, align):
    """Largest multiple of `align` that divides `dim` and is <= max(pref, align)."""
    assert dim % align == 0, (dim, align)   # callers must pre-pad
    t = max(align, (min(dim, max(pref, align)) // align) * align)
    while dim % t != 0:
        t -= align
    return t


# ---------------------------------------------------------------------------
# Kernel A: bias-fused GEMM  out = x @ w + b  (x, w in bf16; f32 accumulate).
# Grid is (N_tiles, M_tiles): the weight/bias block index depends only on the
# OUTER axis, so it stays resident in VMEM while the M tiles stream.
# ---------------------------------------------------------------------------
def _matmul_bias_kernel(x_ref, w_ref, b_ref, o_ref):
    acc = jnp.dot(x_ref[...], w_ref[...], preferred_element_type=jnp.float32)
    o_ref[...] = (acc + b_ref[...]).astype(o_ref.dtype)


def matmul_bias(x, w, b, *, tm_pref=256, tn_pref=512, out_dtype=jnp.float32):
    """x: (M, K) bf16, w: (K, N) bf16 pre-transposed, b: (1, N) f32.
    M % 8 == 0, N % 128 == 0."""
    M, K = x.shape
    _, N = w.shape
    tm = _pick_tile(M, tm_pref, SUBLANE)
    tn = _pick_tile(N, tn_pref, LANE)
    grid = (N // tn, M // tm)          # weight tile outer, M tile inner (weight-stationary)
    return pl.pallas_call(
        _matmul_bias_kernel,
        out_shape=jax.ShapeDtypeStruct((M, N), out_dtype),
        grid_spec=pltpu.PrefetchScalarGridSpec(
            num_scalar_prefetch=0,
            grid=grid,
            in_specs=[
                pl.BlockSpec((tm, K), lambda j, i: (i, 0)),   # streams
                pl.BlockSpec((K, tn), lambda j, i: (0, j)),   # constant over inner axis -> no re-DMA
                pl.BlockSpec((1, tn), lambda j, i: (0, j)),   # bias, constant over inner axis
            ],
            out_specs=pl.BlockSpec((tm, tn), lambda j, i: (i, j)),
        ),
        compiler_params=pltpu.CompilerParams(
            dimension_semantics=("parallel", "parallel"),
            vmem_limit_bytes=_VMEM_LIMIT_BYTES),
    )(x, w, b)


# ---------------------------------------------------------------------------
# Kernel B: the truly sequential part.  Per time step only
#   gates = gates_x[t] + h @ W_hh^T ;  gate nonlinearities ;  update h, c
# W_hh^T lives in HBM (memory_space=pl.ANY) and is copied ONCE into a VMEM
# scratch on the first grid step (single copy, no double-buffering).
# h/c carries live in f32 VMEM scratch across grid steps.
# ---------------------------------------------------------------------------
def _lstm_recur_kernel(gx_ref, whh_hbm, hseq_ref, whh_vmem, h_ref, c_ref, dma_sem):
    Hp = h_ref.shape[-1]
    Tb = gx_ref.shape[0]

    @pl.when(pl.program_id(0) == 0)
    def _():
        cp = pltpu.make_async_copy(whh_hbm, whh_vmem, dma_sem)
        cp.start()
        cp.wait()
        h_ref[...] = jnp.zeros_like(h_ref)
        c_ref[...] = jnp.zeros_like(c_ref)

    whhT = whh_vmem[...]              # (Hp, 4*Hp) bf16, resident for the whole grid

    def step(s, carry):
        h, c = carry                  # f32 carries
        gates = (gx_ref[s].astype(jnp.float32)
                 + jnp.dot(h.astype(jnp.bfloat16), whhT,
                           preferred_element_type=jnp.float32))
        # PyTorch gate order [i, f, g, o]; Hp is a multiple of 128 so each slice
        # is lane-tile aligned.  Gate math stays in f32 (v5e VPU/EUP).
        i_g = jax.nn.sigmoid(gates[:, 0 * Hp:1 * Hp])
        f_g = jax.nn.sigmoid(gates[:, 1 * Hp:2 * Hp])
        g_g = jnp.tanh(gates[:, 2 * Hp:3 * Hp])
        o_g = jax.nn.sigmoid(gates[:, 3 * Hp:4 * Hp])
        c_new = f_g * c + i_g * g_g
        h_new = o_g * jnp.tanh(c_new)
        hseq_ref[s] = h_new.astype(hseq_ref.dtype)
        return (h_new, c_new)

    # Unroll bounded at 8 to limit vreg live ranges (spill risk at large Hp).
    h, c = lax.fori_loop(0, Tb, step, (h_ref[...], c_ref[...]),
                         unroll=min(Tb, 8))
    h_ref[...] = h
    c_ref[...] = c


def lstm_recurrence(gates_x, w_hhT, *, time_block):
    """gates_x: (T, Bp, 4*Hp) bf16 time-major, w_hhT: (Hp, 4*Hp) bf16.
    Returns h_seq (T, Bp, Hp) bf16."""
    T, Bp, G4 = gates_x.shape
    Hp = w_hhT.shape[0]
    return pl.pallas_call(
        _lstm_recur_kernel,
        out_shape=jax.ShapeDtypeStruct((T, Bp, Hp), jnp.bfloat16),
        grid_spec=pltpu.PrefetchScalarGridSpec(
            num_scalar_prefetch=0,
            grid=(T // time_block,),
            in_specs=[
                pl.BlockSpec((time_block, Bp, G4), lambda t: (t, 0, 0)),  # gates_x block
                pl.BlockSpec(memory_space=pl.ANY),                        # W_hh^T stays in HBM
            ],
            out_specs=pl.BlockSpec((time_block, Bp, Hp), lambda t: (t, 0, 0)),
            scratch_shapes=[
                pltpu.VMEM((Hp, G4), jnp.bfloat16),   # resident W_hh^T (single copy)
                pltpu.VMEM((Bp, Hp), jnp.float32),    # h carry
                pltpu.VMEM((Bp, Hp), jnp.float32),    # c carry
                pltpu.SemaphoreType.DMA(()),          # for the one-time W_hh copy
            ],
        ),
        compiler_params=pltpu.CompilerParams(
            dimension_semantics=("arbitrary",),       # recurrence is sequential
            vmem_limit_bytes=_VMEM_LIMIT_BYTES),
    )(gates_x, w_hhT)


# ---------------------------------------------------------------------------
# Module wrapper
# ---------------------------------------------------------------------------
class DecoderRNNPallas:
    def __init__(self, embed_size, hidden_size, vocab_size, key):
        self.embed_size = embed_size
        self.hidden_dim = hidden_size
        self.vocab_size = vocab_size
        self.Hp = _round_up(hidden_size, LANE)
        self.Vp = _round_up(vocab_size, LANE)

        ks = jax.random.split(key, 7)
        s = 0.1
        H, E, V = hidden_size, embed_size, vocab_size
        # f32 "master" parameters (also used by the pure-JAX reference).
        self.embedding = s * jax.random.normal(ks[0], (V, E), jnp.float32)
        self.w_ih = s * jax.random.normal(ks[1], (4 * H, E), jnp.float32)
        self.w_hh = s * jax.random.normal(ks[2], (4 * H, H), jnp.float32)
        b_ih = s * jax.random.normal(ks[3], (4 * H,), jnp.float32)
        b_hh = s * jax.random.normal(ks[4], (4 * H,), jnp.float32)
        self.b_sum = b_ih + b_hh
        self.w_fc = s * jax.random.normal(ks[5], (V, H), jnp.float32)
        self.b_fc = s * jax.random.normal(ks[6], (V,), jnp.float32)

        # Pre-transposed, per-gate lane-padded, bf16 parameters.
        # NOTE: padded rows/cols MUST stay exactly zero -- that keeps padded hidden
        # lanes at 0 through the recurrence and padded vocab lanes at bias-only,
        # which are then sliced off.  Do not initialize the padded regions.
        Hp, Vp = self.Hp, self.Vp
        w_ihT = jnp.zeros((E, 4 * Hp), jnp.float32)
        w_hhT = jnp.zeros((Hp, 4 * Hp), jnp.float32)
        b_gates = jnp.zeros((1, 4 * Hp), jnp.float32)
        for g in range(4):
            w_ihT = w_ihT.at[:, g * Hp:g * Hp + H].set(self.w_ih[g * H:(g + 1) * H, :].T)
            w_hhT = w_hhT.at[:H, g * Hp:g * Hp + H].set(self.w_hh[g * H:(g + 1) * H, :].T)
            b_gates = b_gates.at[0, g * Hp:g * Hp + H].set(self.b_sum[g * H:(g + 1) * H])
        self.w_ihT = w_ihT.astype(jnp.bfloat16)      # (E, 4*Hp)
        self.w_hhT = w_hhT.astype(jnp.bfloat16)      # (Hp, 4*Hp)
        self.b_gates = b_gates                       # (1, 4*Hp) f32
        self.w_fcT = (jnp.zeros((Hp, Vp), jnp.float32)
                      .at[:H, :V].set(self.w_fc.T)).astype(jnp.bfloat16)
        self.b_fc_p = jnp.zeros((1, Vp), jnp.float32).at[0, :V].set(self.b_fc)

    def forward(self, features, captions):
        # features: (B, E) float32 ; captions: (B, S) int32
        B = features.shape[0]
        E, V = self.embed_size, self.vocab_size
        Hp, Vp = self.Hp, self.Vp

        captions = captions[:, :-1]                                # drop last token
        emb = jnp.take(self.embedding, captions, axis=0)           # (B, S-1, E) gather (glue)
        x = jnp.concatenate([features[:, None, :], emb], axis=1)   # (B, T, E)
        T = x.shape[1]
        Bp = _round_up(max(B, SUBLANE), SUBLANE)

        # Time padding / block selection: pad T to a multiple of 8, then use the
        # deepest of {32,24,16,8} that divides it (amortizes per-grid-step cost).
        T_pad = _round_up(T, 8)
        tb = next(c for c in (32, 24, 16, 8) if T_pad % c == 0)

        x = jnp.pad(x, ((0, Bp - B), (0, 0), (0, 0)))
        x_tbe = jnp.transpose(x, (1, 0, 2))                        # (T, Bp, E) time-major
        x_tbe = jnp.pad(x_tbe, ((0, T_pad - T), (0, 0), (0, 0)))   # (T_pad, Bp, E)
        x2d = x_tbe.reshape(T_pad * Bp, E).astype(jnp.bfloat16)

        # 1) input projection: single N tile so W_ih is DMA'd exactly once.
        gates_x = matmul_bias(x2d, self.w_ihT, self.b_gates,
                              tm_pref=256, tn_pref=4 * Hp,
                              out_dtype=jnp.bfloat16)
        gates_x = gates_x.reshape(T_pad, Bp, 4 * Hp)

        # 2) sequential LSTM recurrence (only h @ W_hh^T is serial); padded time
        #    steps produce garbage that is sliced off below.
        h_seq = lstm_recurrence(gates_x, self.w_hhT, time_block=tb)   # (T_pad, Bp, Hp) bf16

        # 3) vocab projection, batch-first so no logits-sized transpose is needed;
        #    grid order keeps each W_fc tile resident across the M tiles.
        h_bt = jnp.transpose(h_seq[:T], (1, 0, 2)).reshape(Bp * T, Hp)
        logits = matmul_bias(h_bt, self.w_fcT, self.b_fc_p,
                             tm_pref=512, tn_pref=1024,
                             out_dtype=jnp.float32)                   # (Bp*T, Vp)
        return logits.reshape(Bp, T, Vp)[:B, :, :V]                   # (B, T, V)

    # TODO(synk): `sample` (greedy decode loop with host-side .item()) is host
    # control flow and is not implemented as a kernel.


# ---------------------------------------------------------------------------
# Pure-JAX f32 reference (unpadded, original weight layout) for the sanity check.
# ---------------------------------------------------------------------------
def _reference_forward(model, features, captions):
    captions = captions[:, :-1]
    emb = model.embedding[captions]
    x = jnp.concatenate([features[:, None, :], emb], axis=1)      # (B, T, E)
    B = x.shape[0]
    H = model.hidden_dim
    h = jnp.zeros((B, H), jnp.float32)
    c = jnp.zeros((B, H), jnp.float32)

    def step(carry, x_t):
        h, c = carry
        g = x_t @ model.w_ih.T + h @ model.w_hh.T + model.b_sum
        i = jax.nn.sigmoid(g[:, 0 * H:1 * H])
        f = jax.nn.sigmoid(g[:, 1 * H:2 * H])
        gg = jnp.tanh(g[:, 2 * H:3 * H])
        o = jax.nn.sigmoid(g[:, 3 * H:4 * H])
        c = f * c + i * gg
        h = o * jnp.tanh(c)
        out = h @ model.w_fc.T + model.b_fc
        return (h, c), out

    (_, _), outs = jax.lax.scan(step, (h, c), jnp.transpose(x, (1, 0, 2)))
    return jnp.transpose(outs, (1, 0, 2))


if __name__ == "__main__":
    key = jax.random.PRNGKey(0)
    k_model, k_feat, k_cap = jax.random.split(key, 3)

    batch = 2
    embed_size = 32
    hidden_size = 32
    vocab_size = 64
    seq_len = 8          # captions length; LSTM runs over T = seq_len steps

    model = DecoderRNNPallas(embed_size, hidden_size, vocab_size, k_model)

    features = jax.random.normal(k_feat, (batch, embed_size), jnp.float32)
    captions = jax.random.randint(k_cap, (batch, seq_len), 0, vocab_size, jnp.int32)

    out = model.forward(features, captions)
    out = jax.block_until_ready(out)
    assert out.shape == (batch, seq_len, vocab_size), out.shape

    ref = _reference_forward(model, features, captions)
    # Matmul operands / intermediates are bf16 (f32 accumulation), so compare
    # against the f32 reference with a correspondingly looser tolerance.
    assert jnp.allclose(out, ref, atol=5e-2, rtol=5e-2), "mismatch vs reference"

    print("KERNEL_OK")
</pallas_src>

<mosaic_0001>
module attributes {stable_mosaic.version = 11 : i64} {
  func.func @_matmul_bias_kernel(%arg0: i32, %arg1: i32, %arg2: memref<64x32xbf16, #tpu.memory_space<vmem>>, %arg3: memref<32x512xbf16, #tpu.memory_space<vmem>>, %arg4: memref<1x512xf32, #tpu.memory_space<vmem>>, %arg5: memref<64x512xbf16, #tpu.memory_space<vmem>>) attributes {dimension_semantics = [#tpu.dimension_semantics<parallel>, #tpu.dimension_semantics<parallel>], iteration_bounds = array<i64: 1, 1>, scalar_prefetch = 0 : i64, scratch_operands = 0 : i64, tpu.core_type = #tpu.core_type<tc>, window_params = [{transform_indices = @transform_0, window_bounds = array<i64: 64, 32>}, {transform_indices = @transform_1, window_bounds = array<i64: 32, 512>}, {transform_indices = @transform_2, window_bounds = array<i64: 1, 512>}, {transform_indices = @transform_3, window_bounds = array<i64: 64, 512>}]} {
    %c0 = arith.constant 0 : index
    %c0_0 = arith.constant 0 : index
    %0 = vector.load %arg2[%c0, %c0_0] : memref<64x32xbf16, #tpu.memory_space<vmem>>, vector<64x32xbf16>
    %c0_1 = arith.constant 0 : index
    %c0_2 = arith.constant 0 : index
    %1 = vector.load %arg3[%c0_1, %c0_2] : memref<32x512xbf16, #tpu.memory_space<vmem>>, vector<32x512xbf16>
    %cst = arith.constant dense<0.000000e+00> : vector<64x512xf32>
    %2 = tpu.matmul %0, %1, %cst {dimension_numbers = #tpu.dot_dimension_numbers<[1], [0], [0], [1], [0, 0, 1, 1], [], []>} : vector<64x32xbf16>, vector<32x512xbf16>, vector<64x512xf32> -> vector<64x512xf32>
    %c0_3 = arith.constant 0 : index
    %c0_4 = arith.constant 0 : index
    %3 = vector.load %arg4[%c0_3, %c0_4] : memref<1x512xf32, #tpu.memory_space<vmem>>, vector<1x512xf32>
    %4 = vector.broadcast %3 : vector<1x512xf32> to vector<64x512xf32>
    %5 = arith.addf %2, %4 : vector<64x512xf32>
    %6 = arith.truncf %5 : vector<64x512xf32> to vector<64x512xbf16>
    %c0_5 = arith.constant 0 : index
    %c0_6 = arith.constant 0 : index
    %7 = vector.load %arg5[%c0_5, %c0_6] : memref<64x512xbf16, #tpu.memory_space<vmem>>, vector<64x512xbf16>
    tpu.vector_store %arg5[%c0_5, %c0_6], %6 {strides = array<i32>} : memref<64x512xbf16, #tpu.memory_space<vmem>>, vector<64x512xbf16>,
    return
  }
  func.func @transform_0(%arg0: i32, %arg1: i32) -> (i32, i32) {
    %c0_i32 = arith.constant 0 : i32
    %c0_i32_0 = arith.constant 0 : i32
    return %arg1, %c0_i32 : i32, i32
  }
  func.func @transform_1(%arg0: i32, %arg1: i32) -> (i32, i32) {
    %c0_i32 = arith.constant 0 : i32
    %c0_i32_0 = arith.constant 0 : i32
    return %c0_i32, %arg0 : i32, i32
  }
  func.func @transform_2(%arg0: i32, %arg1: i32) -> (i32, i32) {
    %c0_i32 = arith.constant 0 : i32
    %c0_i32_0 = arith.constant 0 : i32
    return %c0_i32, %arg0 : i32, i32
  }
  func.func @transform_3(%arg0: i32, %arg1: i32) -> (i32, i32) {
    %c0_i32 = arith.constant 0 : i32
    return %arg1, %arg0 : i32, i32
  }
}

</mosaic_0001>

<llo_original>
// kernel: tpu_custom_call.1
$region0: #{tpu_custom_call.1}
  #allocation0 [shape = 'u32[]', space=smem, size = 0x4, offset = 0x4, fixed_abs, tag = 'smem constant byte address 0x4 - core index']
  #allocation1 [shape = 'u32[144,128]{1,0:T(1,128)}', space=vmem, size = 0x12000, scoped, tag = 'internal scratch']
  %s0 = inlined_call_operand.vmem [shape: bf16[64,32], index: 0, kind: input, shape index: {}]
  %s1 = inlined_call_operand.hbm [shape: bf16[32,512], index: 1, kind: input, shape index: {}]
  %s2 = inlined_call_operand.vmem [shape: f32[1,512], index: 2, kind: input, shape index: {}]
  %s3 = inlined_call_operand.hbm [shape: bf16[64,512], index: 3, kind: output, shape index: {}]
  %s4 = sld [smem:[#allocation0]]
  $region26: #{tpu_custom_call.1} parent=0
    _
  %s6 = ssub.s32 1, %s4
  %s7 = scalar_select 0, %s6, %s4
  $region1: #{tpu_custom_call.1} parent=0
    #allocation2 [shape = 'u8[32768]{0}', space=vmem, size = 0x8000, scoped, tag = 'input window, operand 1, single buffered']
    #allocation3 [shape = 's32[1]{0}', space=sflag, size = 0x4, scoped, tag = 'scoped memory for tpu_custom_call.1']
    #allocation4 [shape = 's32[1]{0}', space=sflag, size = 0x4, scoped, tag = 'scoped memory for tpu_custom_call.1']
    #allocation5 [shape = 'u8[65536]{0}', space=vmem, size = 0x10000, scoped, tag = 'output window, operand 0, single buffered']
    %8 = vsyncpa [#allocation3], 0
    %9 = vsyncpa [#allocation4], 0
    // Predicated region
    $region2: #{tpu_custom_call.1} parent=1 // pred_check
      _
    $region3: #{tpu_custom_call.1} parent=1 // pred_check_branch
      %11 = sbr.rel (0) target = $region5
    $region4: #{tpu_custom_call.1} parent=1 // pred_region
      _
    $region5: #{tpu_custom_call.1} parent=1 // pred_fallthru
      _
    // Predicated region
    $region6: #{tpu_custom_call.1} parent=1 // pred_check
      _
    $region7: #{tpu_custom_call.1} parent=1 // pred_check_branch
      %13 = sbr.rel (0) target = $region9
    $region8: #{tpu_custom_call.1} parent=1 // pred_region
      %s15 = ssub.s32 1024, 1024
      %16 = vsyncadd [#allocation3], %s15
      %s17 = sshll.u32 [#allocation2], 4
      %s18 = int_to_ptr.vmem [resolvable:$true] %s17
      %23 = dma.hbm_to_vmem [thread:$0]  %s1, 1024, %s18, [#allocation3], 256, 256, 16
    $region9: #{tpu_custom_call.1} parent=1 // pred_fallthru
      _
    // Predicated region
    $region10: #{tpu_custom_call.1} parent=1 // pred_check
      _
    $region11: #{tpu_custom_call.1} parent=1 // pred_check_branch
      %25 = sbr.rel (0) target = $region13
    $region12: #{tpu_custom_call.1} parent=1 // pred_region
      _
    $region13: #{tpu_custom_call.1} parent=1 // pred_fallthru
      _
    // Predicated region
    $region14: #{tpu_custom_call.1} parent=1 // pred_check
      _
    $region15: #{tpu_custom_call.1} parent=1 // pred_check_branch
      %27 = sbr.rel (0) target = $region17
    $region16: #{tpu_custom_call.1} parent=1 // pred_region
      %28 = dma.done [#allocation3], 1024
    $region17: #{tpu_custom_call.1} parent=1 // pred_fallthru
      _
    %v30 = vld [vmem:[%s0] sm:$0xf]
    %v31 = vld [vmem:[%s0 + $0x4] sm:$0xf]
    %v32 = vld [vmem:[%s0 + $0x8] sm:$0xf]
    %v33 = vld [vmem:[%s0 + $0xc] sm:$0xf]
    %v34 = vld [vmem:[%s0 + $0x10] sm:$0xf]
    %v35 = vld [vmem:[%s0 + $0x14] sm:$0xf]
    %v36 = vld [vmem:[%s0 + $0x18] sm:$0xf]
    %v37 = vld [vmem:[%s0 + $0x1c] sm:$0xf]
    %v38 = vld [vmem:[#allocation2] sm:$0xff]
    %v39 = vld [vmem:[#allocation2 + $0x8] sm:$0xff]
    %v40 = vld [vmem:[#allocation2 + $0x10] sm:$0xff]
    %v41 = vld [vmem:[#allocation2 + $0x18] sm:$0xff]
    %v42 = vld [vmem:[#allocation2 + $0x20] sm:$0xff]
    %v43 = vld [vmem:[#allocation2 + $0x28] sm:$0xff]
    %v44 = vld [vmem:[#allocation2 + $0x30] sm:$0xff]
    %v45 = vld [vmem:[#allocation2 + $0x38] sm:$0xff]
    %v46 = vld [vmem:[%s2] sm:$0xf]
    %v48 = vlaneseq
    %v49 = vshrl.u32 %v48, 7
    %v50 = vsub.s32 0, %v49
    %v51 = vrot.slane %v46, %v50
    %v52 = vlaneseq
    %v53 = vshrl.u32 %v52, 7
    %v54 = vsub.s32 1, %v53
    %v55 = vrot.slane %v46, %v54
    %v56 = vlaneseq
    %v57 = vshrl.u32 %v56, 7
    %v58 = vsub.s32 2, %v57
    %v59 = vrot.slane %v46, %v58
    %v60 = vlaneseq
    %v61 = vshrl.u32 %v60, 7
    %v62 = vsub.s32 3, %v61
    %v63 = vrot.slane %v46, %v62
    %v76 = vunpack.c.l.b16 %v30
    %v77 = vunpack.c.l.b16 %v31
    %v78 = vunpack.c.l.b16 %v32
    %v79 = vunpack.c.l.b16 %v33
    %v80 = vunpack.c.l.b16 %v34
    %v81 = vunpack.c.l.b16 %v35
    %v82 = vunpack.c.l.b16 %v36
    %v83 = vunpack.c.l.b16 %v37
    %v84 = vpack.c.b16 %v77, %v76
    %v85 = vpack.c.b16 %v79, %v78
    %v86 = vpack.c.b16 %v81, %v80
    %v87 = vpack.c.b16 %v83, %v82
    %v96 = vunpack.c.l.b16 %v38
    %v97 = vunpack.c.h.b16 %v38
    %v98 = vunpack.c.l.b16 %v39
    %v99 = vunpack.c.h.b16 %v39
    %v100 = vunpack.c.l.b16 %v40
    %v101 = vunpack.c.h.b16 %v40
    %v102 = vunpack.c.l.b16 %v41
    %v103 = vunpack.c.h.b16 %v41
    %v104 = vunpack.c.l.b16 %v42
    %v105 = vunpack.c.h.b16 %v42
    %v106 = vunpack.c.l.b16 %v43
    %v107 = vunpack.c.h.b16 %v43
    %v108 = vunpack.c.l.b16 %v44
    %v109 = vunpack.c.h.b16 %v44
    %v110 = vunpack.c.l.b16 %v45
    %v111 = vunpack.c.h.b16 %v45
    %v112 = vpack.c.b16 %v100, %v96
    %v113 = vpack.c.b16 %v101, %v97
    %v114 = vpack.c.b16 %v102, %v98
    %v115 = vpack.c.b16 %v103, %v99
    %v116 = vpack.c.b16 %v108, %v104
    %v117 = vpack.c.b16 %v109, %v105
    %v118 = vpack.c.b16 %v110, %v106
    %v119 = vpack.c.b16 %v111, %v107
    %vm128 = vcmask 261120
    %v130 = vsel %vm128, %v84, 0
    %v133 = vsel %vm128, %v85, 0
    %v136 = vsel %vm128, %v86, 0
    %v139 = vsel %vm128, %v87, 0
    %141 = vmatprep.subr.bf16.mxu0 0
    %142 = vmatpush1.bf16.msra.mxu0 0
    %143 = vmatprep.subr.bf16.mxu0 0
    %144 = vmatpush1.bf16.msra.mxu0 0
    %145 = vmatprep.subr.bf16.mxu0 0
    %146 = vmatpush1.bf16.msra.mxu0 0
    %147 = vmatprep.subr.bf16.mxu0 0
    %148 = vmatpush1.bf16.msra.mxu0 0
    %149 = vmatprep.subr.bf16.mxu0 0
    %150 = vmatpush1.bf16.msra.mxu0 0
    %151 = vmatprep.subr.bf16.mxu0 0
    %152 = vmatpush1.bf16.msra.mxu0 0
    %153 = vmatprep.subr.bf16.mxu0 %v117
    %154 = vmatpush1.bf16.msra.mxu0 %v116
    %155 = vmatprep.subr.bf16.mxu0 %v113
    %156 = vmatpush1.bf16.msra.mxu0 %v112
    %157 = vmatprep.subr.bf16.mxu0 0
    %158 = vmatpush2.bf16.msra.mxu0 0
    %159 = vmatprep.subr.bf16.mxu0 0
    %160 = vmatpush2.bf16.msra.mxu0 0
    %161 = vmatprep.subr.bf16.mxu0 0
    %162 = vmatpush2.bf16.msra.mxu0 0
    %163 = vmatprep.subr.bf16.mxu0 0
    %164 = vmatpush2.bf16.msra.mxu0 0
    %165 = vmatprep.subr.bf16.mxu0 0
    %166 = vmatpush2.bf16.msra.mxu0 0
    %167 = vmatprep.subr.bf16.mxu0 0
    %168 = vmatpush2.bf16.msra.mxu0 0
    %169 = vmatprep.subr.bf16.mxu0 0
    %170 = vmatpush2.bf16.msra.mxu0 0
    %171 = vmatprep.subr.bf16.mxu0 0
    %172 = vmatpush2.bf16.msra.mxu0 0
    %173 = vmatprep.mubr.bf16.mxu0 0
    %174 = vmatmul.mubr.bf16.gmra.mxu0 %v130
    %v175 = vpop.f32.mrf.mxu0
    %v176 = vadd.f32 %v51, %v175
    %v177 = vpop.f32.mrf.mxu0
    %v178 = vadd.f32 %v55, %v177
    %v179 = vpop.f32.mrf.mxu0
    %v180 = vadd.f32 %v51, %v179
    %v181 = vpop.f32.mrf.mxu0
    %v182 = vadd.f32 %v55, %v181
    %183 = vmatprep.mubr.bf16.mxu0 0
    %184 = vmatmul.mubr.bf16.gmra.mxu0 %v133
    %v185 = vpop.f32.mrf.mxu0
    %v186 = vadd.f32 %v51, %v185
    %v187 = vpop.f32.mrf.mxu0
    %v188 = vadd.f32 %v55, %v187
    %v189 = vpop.f32.mrf.mxu0
    %v190 = vadd.f32 %v51, %v189
    %v191 = vpop.f32.mrf.mxu0
    %v192 = vadd.f32 %v55, %v191
    %193 = vmatprep.mubr.bf16.mxu0 0
    %194 = vmatmul.mubr.bf16.gmra.mxu0 %v136
    %v195 = vpop.f32.mrf.mxu0
    %v196 = vadd.f32 %v51, %v195
    %v197 = vpop.f32.mrf.mxu0
    %v198 = vadd.f32 %v55, %v197
    %v199 = vpop.f32.mrf.mxu0
    %v200 = vadd.f32 %v51, %v199
    %v201 = vpop.f32.mrf.mxu0
    %v202 = vadd.f32 %v55, %v201
    %203 = vmatprep.mubr.bf16.mxu0 0
    %204 = vmatmul.mubr.bf16.gmra.mxu0 %v139
    %v205 = vpop.f32.mrf.mxu0
    %v206 = vadd.f32 %v51, %v205
    %v207 = vpop.f32.mrf.mxu0
    %v208 = vadd.f32 %v55, %v207
    %v209 = vpop.f32.mrf.mxu0
    %v210 = vadd.f32 %v51, %v209
    %v211 = vpop.f32.mrf.mxu0
    %v212 = vadd.f32 %v55, %v211
    %213 = vdwg.mxu0
    %214 = vmatprep.subr.bf16.mxu0 0
    %215 = vmatpush1.bf16.msra.mxu0 0
    %216 = vmatprep.subr.bf16.mxu0 0
    %217 = vmatpush1.bf16.msra.mxu0 0
    %218 = vmatprep.subr.bf16.mxu0 0
    %219 = vmatpush1.bf16.msra.mxu0 0
    %220 = vmatprep.subr.bf16.mxu0 0
    %221 = vmatpush1.bf16.msra.mxu0 0
    %222 = vmatprep.subr.bf16.mxu0 0
    %223 = vmatpush1.bf16.msra.mxu0 0
    %224 = vmatprep.subr.bf16.mxu0 0
    %225 = vmatpush1.bf16.msra.mxu0 0
    %226 = vmatprep.subr.bf16.mxu0 %v119
    %227 = vmatpush1.bf16.msra.mxu0 %v118
    %228 = vmatprep.subr.bf16.mxu0 %v115
    %229 = vmatpush1.bf16.msra.mxu0 %v114
    %230 = vmatprep.subr.bf16.mxu0 0
    %231 = vmatpush2.bf16.msra.mxu0 0
    %232 = vmatprep.subr.bf16.mxu0 0
    %233 = vmatpush2.bf16.msra.mxu0 0
    %234 = vmatprep.subr.bf16.mxu0 0
    %235 = vmatpush2.bf16.msra.mxu0 0
    %236 = vmatprep.subr.bf16.mxu0 0
    %237 = vmatpush2.bf16.msra.mxu0 0
    %238 = vmatprep.subr.bf16.mxu0 0
    %239 = vmatpush2.bf16.msra.mxu0 0
    %240 = vmatprep.subr.bf16.mxu0 0
    %241 = vmatpush2.bf16.msra.mxu0 0
    %242 = vmatprep.subr.bf16.mxu0 0
    %243 = vmatpush2.bf16.msra.mxu0 0
    %244 = vmatprep.subr.bf16.mxu0 0
    %245 = vmatpush2.bf16.msra.mxu0 0
    %246 = vmatprep.mubr.bf16.mxu0 0
    %247 = vmatmul.mubr.bf16.gmra.mxu0 %v130
    %v248 = vpop.f32.mrf.mxu0
    %v249 = vadd.f32 %v59, %v248
    %v250 = vpop.f32.mrf.mxu0
    %v251 = vadd.f32 %v63, %v250
    %v252 = vpop.f32.mrf.mxu0
    %v253 = vadd.f32 %v59, %v252
    %v254 = vpop.f32.mrf.mxu0
    %v255 = vadd.f32 %v63, %v254
    %256 = vmatprep.mubr.bf16.mxu0 0
    %257 = vmatmul.mubr.bf16.gmra.mxu0 %v133
    %v258 = vpop.f32.mrf.mxu0
    %v259 = vadd.f32 %v59, %v258
    %v260 = vpop.f32.mrf.mxu0
    %v261 = vadd.f32 %v63, %v260
    %v262 = vpop.f32.mrf.mxu0
    %v263 = vadd.f32 %v59, %v262
    %v264 = vpop.f32.mrf.mxu0
    %v265 = vadd.f32 %v63, %v264
    %266 = vmatprep.mubr.bf16.mxu0 0
    %267 = vmatmul.mubr.bf16.gmra.mxu0 %v136
    %v268 = vpop.f32.mrf.mxu0
    %v269 = vadd.f32 %v59, %v268
    %v270 = vpop.f32.mrf.mxu0
    %v271 = vadd.f32 %v63, %v270
    %v272 = vpop.f32.mrf.mxu0
    %v273 = vadd.f32 %v59, %v272
    %v274 = vpop.f32.mrf.mxu0
    %v275 = vadd.f32 %v63, %v274
    %276 = vmatprep.mubr.bf16.mxu0 0
    %277 = vmatmul.mubr.bf16.gmra.mxu0 %v139
    %v278 = vpop.f32.mrf.mxu0
    %v279 = vadd.f32 %v59, %v278
    %v280 = vpop.f32.mrf.mxu0
    %v281 = vadd.f32 %v63, %v280
    %v282 = vpop.f32.mrf.mxu0
    %v283 = vadd.f32 %v59, %v282
    %v284 = vpop.f32.mrf.mxu0
    %v285 = vadd.f32 %v63, %v284
    %286 = vdwg.mxu0
    %v287 = vpack.c.bf16 %v180, %v176
    %v288 = vpack.c.bf16 %v182, %v178
    %v289 = vpack.c.bf16 %v253, %v249
    %v290 = vpack.c.bf16 %v255, %v251
    %v291 = vpack.c.bf16 %v190, %v186
    %v292 = vpack.c.bf16 %v192, %v188
    %v293 = vpack.c.bf16 %v263, %v259
    %v294 = vpack.c.bf16 %v265, %v261
    %v295 = vpack.c.bf16 %v200, %v196
    %v296 = vpack.c.bf16 %v202, %v198
    %v297 = vpack.c.bf16 %v273, %v269
    %v298 = vpack.c.bf16 %v275, %v271
    %v299 = vpack.c.bf16 %v210, %v206
    %v300 = vpack.c.bf16 %v212, %v208
    %v301 = vpack.c.bf16 %v283, %v279
    %v302 = vpack.c.bf16 %v285, %v281
    %v319 = vunpack.c.l.b16 %v287
    %v320 = vunpack.c.l.b16 %v288
    %v321 = vunpack.c.l.b16 %v289
    %v322 = vunpack.c.l.b16 %v290
    %v323 = vunpack.c.h.b16 %v287
    %v324 = vunpack.c.h.b16 %v288
    %v325 = vunpack.c.h.b16 %v289
    %v326 = vunpack.c.h.b16 %v290
    %v327 = vunpack.c.l.b16 %v291
    %v328 = vunpack.c.l.b16 %v292
    %v329 = vunpack.c.l.b16 %v293
    %v330 = vunpack.c.l.b16 %v294
    %v331 = vunpack.c.h.b16 %v291
    %v332 = vunpack.c.h.b16 %v292
    %v333 = vunpack.c.h.b16 %v293
    %v334 = vunpack.c.h.b16 %v294
    %v335 = vunpack.c.l.b16 %v295
    %v336 = vunpack.c.l.b16 %v296
    %v337 = vunpack.c.l.b16 %v297
    %v338 = vunpack.c.l.b16 %v298
    %v339 = vunpack.c.h.b16 %v295
    %v340 = vunpack.c.h.b16 %v296
    %v341 = vunpack.c.h.b16 %v297
    %v342 = vunpack.c.h.b16 %v298
    %v343 = vunpack.c.l.b16 %v299
    %v344 = vunpack.c.l.b16 %v300
    %v345 = vunpack.c.l.b16 %v301
    %v346 = vunpack.c.l.b16 %v302
    %v347 = vunpack.c.h.b16 %v299
    %v348 = vunpack.c.h.b16 %v300
    %v349 = vunpack.c.h.b16 %v301
    %v350 = vunpack.c.h.b16 %v302
    %v351 = vpack.c.b16 %v320, %v319
    %v352 = vpack.c.b16 %v322, %v321
    %v353 = vpack.c.b16 %v324, %v323
    %v354 = vpack.c.b16 %v326, %v325
    %v355 = vpack.c.b16 %v328, %v327
    %v356 = vpack.c.b16 %v330, %v329
    %v357 = vpack.c.b16 %v332, %v331
    %v358 = vpack.c.b16 %v334, %v333
    %v359 = vpack.c.b16 %v336, %v335
    %v360 = vpack.c.b16 %v338, %v337
    %v361 = vpack.c.b16 %v340, %v339
    %v362 = vpack.c.b16 %v342, %v341
    %v363 = vpack.c.b16 %v344, %v343
    %v364 = vpack.c.b16 %v346, %v345
    %v365 = vpack.c.b16 %v348, %v347
    %v366 = vpack.c.b16 %v350, %v349
    %383 = vst [vmem:[#allocation5] sm:$0xff] %v351
    %384 = vst [vmem:[#allocation5 + $0x8] sm:$0xff] %v352
    %385 = vst [vmem:[#allocation5 + $0x10] sm:$0xff] %v353
    %386 = vst [vmem:[#allocation5 + $0x18] sm:$0xff] %v354
    %387 = vst [vmem:[#allocation5 + $0x20] sm:$0xff] %v355
    %388 = vst [vmem:[#allocation5 + $0x28] sm:$0xff] %v356
    %389 = vst [vmem:[#allocation5 + $0x30] sm:$0xff] %v357
    %390 = vst [vmem:[#allocation5 + $0x38] sm:$0xff] %v358
    %391 = vst [vmem:[#allocation5 + $0x40] sm:$0xff] %v359
    %392 = vst [vmem:[#allocation5 + $0x48] sm:$0xff] %v360
    %393 = vst [vmem:[#allocation5 + $0x50] sm:$0xff] %v361
    %394 = vst [vmem:[#allocation5 + $0x58] sm:$0xff] %v362
    %395 = vst [vmem:[#allocation5 + $0x60] sm:$0xff] %v363
    %396 = vst [vmem:[#allocation5 + $0x68] sm:$0xff] %v364
    %397 = vst [vmem:[#allocation5 + $0x70] sm:$0xff] %v365
    %398 = vst [vmem:[#allocation5 + $0x78] sm:$0xff] %v366
    // Predicated region
    $region18: #{tpu_custom_call.1} parent=1 // pred_check
      _
    $region19: #{tpu_custom_call.1} parent=1 // pred_check_branch
      %400 = sbr.rel (0) target = $region21
    $region20: #{tpu_custom_call.1} parent=1 // pred_region
      %s402 = ssub.s32 2048, 2048
      %403 = vsyncadd [#allocation4], %s402
      %s404 = sshll.u32 [#allocation5], 4
      %s405 = int_to_ptr.vmem [resolvable:$true] %s404
      %410 = dma.vmem_to_hbm [thread:$0]  %s405, 2048, %s3, [#allocation4], 256, 256, 16
    $region21: #{tpu_custom_call.1} parent=1 // pred_fallthru
      _
    // Predicated region
    $region22: #{tpu_custom_call.1} parent=1 // pred_check
      _
    $region23: #{tpu_custom_call.1} parent=1 // pred_check_branch
      %412 = sbr.rel (0) target = $region25
    $region24: #{tpu_custom_call.1} parent=1 // pred_region
      %413 = dma.done [#allocation4], 2048
    $region25: #{tpu_custom_call.1} parent=1 // pred_fallthru
      _
    %414 = vsyncpa [#allocation3], 1
    %415 = vsyncpa [#allocation4], 1

</llo_original>
